<compile_context>
chip_gen: v6e
topology: v6e:2x2x1
jax: 0.10.0
libtpu: 0.0.40
codegen_flags: <defaults>
</compile_context>

<pallas_src>
import jax
import jax.numpy as jnp
from jax import lax
from jax.experimental import pallas as pl
from jax.experimental.pallas import tpu as pltpu


def _round_up(x, m):
    return ((x + m - 1) // m) * m


def _largest_dividing_tile(padded_dim, max_tile):
    """Largest multiple of 128 that divides `padded_dim` (itself a 128-multiple)
    and is <= max_tile.  Guarantees zero extra padding beyond 128 alignment."""
    blocks = padded_dim // 128
    max_b = max(1, min(blocks, max_tile // 128))
    for d in range(max_b, 0, -1):
        if blocks % d == 0:
            return d * 128
    return 128


def _default_tile_mn():
    """Per-generation output-tile edge: 1024 fits the 32 MiB default scoped
    VMEM on v6e/v7x; 512 is safe under v5e's 16 MiB default (and everywhere)."""
    try:
        kind = jax.devices()[0].device_kind.lower()
    except Exception:
        return 512
    if "v6" in kind or "v7" in kind:
        return 1024
    return 512


# ---------------------------------------------------------------------------
# Kernels
# ---------------------------------------------------------------------------

def _sim_tile_kernel_single_k(zn_row_ref, zn_col_ref, out_ref):
    """One (TM, TN) output tile; whole feature dim in a single K strip.
    No accumulator scratch: dot result goes straight to the output tile."""
    out_ref[...] = lax.dot_general(
        zn_row_ref[...], zn_col_ref[...],
        dimension_numbers=(((1,), (1,)), ((), ())),   # NT: contract last dims
        preferred_element_type=jnp.float32,
    ).astype(out_ref.dtype)


def _sim_tile_kernel_multi_k(zn_row_ref, zn_col_ref, out_ref, acc_ref):
    """One (TM, TN) output tile accumulated over K strips (large D only)."""
    k = pl.program_id(2)

    @pl.when(k == 0)
    def _():
        acc_ref[...] = jnp.zeros_like(acc_ref)

    acc_ref[...] += lax.dot_general(
        zn_row_ref[...], zn_col_ref[...],
        dimension_numbers=(((1,), (1,)), ((), ())),   # NT: contract last dims
        preferred_element_type=jnp.float32,
    )

    @pl.when(k == pl.num_programs(2) - 1)
    def _():
        out_ref[...] = acc_ref[...].astype(out_ref.dtype)


# ---------------------------------------------------------------------------
# Wrapper
# ---------------------------------------------------------------------------

def contrastive_forward(xis, xjs, *, compute_dtype=jnp.bfloat16,
                        out_dtype=jnp.float32, tile_mn=None, tile_k=None):
    """Pallas implementation of the contrastive cosine-similarity matrix.

    Args:
      xis: (B, D) first-view embeddings.
      xjs: (B, D) second-view embeddings.
      compute_dtype: MXU operand dtype (bf16 default; jnp.float32 is an exact
        but slower correctness fallback — f32 is emulated on the MXU).
      out_dtype: output dtype (f32 default; bf16 halves output HBM traffic for
        writeback-bound shapes — numerics change, flag to callers).
      tile_mn / tile_k: max output-tile edge / K-strip size (128-multiples).
    Returns:
      (2B, 2B) cosine-similarity matrix of concat([xis, xjs]) in `out_dtype`.
    """
    assert xis.shape == xjs.shape and xis.ndim == 2
    B, D = xis.shape
    N = 2 * B

    # ---- prologue: concat, normalize ONCE in f32, fold norms into z ----
    z = jnp.concatenate([xis, xjs], axis=0).astype(jnp.float32)   # (2B, D)
    inv_norm = lax.rsqrt(jnp.sum(z * z, axis=-1, keepdims=True) + jnp.float32(1e-12))
    zn = (z * inv_norm).astype(compute_dtype)                     # (2B, D)

    # ---- pad only to 128 multiples (lane alignment), no tile round-up ----
    Np = _round_up(N, 128)
    Dp = _round_up(D, 128)
    zn_p = jnp.pad(zn, ((0, Np - N), (0, Dp - D)))                # zero rows/cols

    # ---- tile selection: tiles divide the padded dims exactly ----
    max_mn = tile_mn if tile_mn is not None else _default_tile_mn()
    max_k = tile_k if tile_k is not None else 1024    # prefer a single K strip
    tmn = _largest_dividing_tile(Np, max_mn)
    tk = _largest_dividing_tile(Dp, max_k)
    gm = Np // tmn
    gn = Np // tmn
    gk = Dp // tk

    # Advisory cost: z is re-streamed gn times for the LHS and gm times for the
    # RHS under the (i,k)/(j,k) index maps; output written once.
    bpe = jnp.dtype(compute_dtype).itemsize
    cost = pl.CostEstimate(
        flops=int(2 * Np * Np * Dp),
        transcendentals=0,
        bytes_accessed=int(Np * Dp * bpe * (gm + gn)
                           + Np * Np * jnp.dtype(out_dtype).itemsize),
    )

    if gk == 1:
        # Common case (projection-head D <= 1024): no accumulator scratch.
        sim_padded = pl.pallas_call(
            _sim_tile_kernel_single_k,
            out_shape=jax.ShapeDtypeStruct((Np, Np), out_dtype),
            grid_spec=pltpu.PrefetchScalarGridSpec(
                num_scalar_prefetch=0,
                grid=(gm, gn),
                in_specs=[
                    pl.BlockSpec((tmn, tk), lambda i, j: (i, 0)),   # LHS row strip
                    pl.BlockSpec((tmn, tk), lambda i, j: (j, 0)),   # RHS row strip (NT)
                ],
                out_specs=pl.BlockSpec((tmn, tmn), lambda i, j: (i, j)),
            ),
            compiler_params=pltpu.CompilerParams(
                dimension_semantics=("parallel", "parallel")),
            cost_estimate=cost,
        )(zn_p, zn_p)
    else:
        sim_padded = pl.pallas_call(
            _sim_tile_kernel_multi_k,
            out_shape=jax.ShapeDtypeStruct((Np, Np), out_dtype),
            grid_spec=pltpu.PrefetchScalarGridSpec(
                num_scalar_prefetch=0,
                grid=(gm, gn, gk),
                in_specs=[
                    pl.BlockSpec((tmn, tk), lambda i, j, k: (i, k)),  # LHS row strip
                    pl.BlockSpec((tmn, tk), lambda i, j, k: (j, k)),  # RHS row strip (NT)
                ],
                out_specs=pl.BlockSpec((tmn, tmn), lambda i, j, k: (i, j)),
                scratch_shapes=[pltpu.VMEM((tmn, tmn), jnp.float32)],
            ),
            compiler_params=pltpu.CompilerParams(
                dimension_semantics=("parallel", "parallel", "arbitrary")),
            cost_estimate=cost,
        )(zn_p, zn_p)

    if Np == N:
        return sim_padded          # no extra N^2 copy when already aligned
    return sim_padded[:N, :N]      # <=127 rows/cols of alignment padding only


def contrastive_forward_ref(xis, xjs):
    """Pure-JAX f32 reference for correctness checking."""
    z = jnp.concatenate([xis, xjs], axis=0).astype(jnp.float32)
    zn = z * lax.rsqrt(jnp.sum(z * z, axis=-1, keepdims=True) + 1e-12)
    return zn @ zn.T


if __name__ == "__main__":
    key = jax.random.PRNGKey(0)
    k1, k2, k3, k4 = jax.random.split(key, 4)

    # --- small shapes: single-K fast path (B=8, D=32 -> 16x16 sims) ---
    B, D = 8, 32
    xis = jax.random.normal(k1, (B, D), dtype=jnp.float32)
    xjs = jax.random.normal(k2, (B, D), dtype=jnp.float32)
    ref = contrastive_forward_ref(xis, xjs)

    sim_bf16 = jax.block_until_ready(contrastive_forward(xis, xjs))
    assert sim_bf16.shape == (2 * B, 2 * B)
    assert jnp.allclose(sim_bf16, ref, atol=2e-2, rtol=2e-2), "bf16 path mismatch"

    sim_f32 = jax.block_until_ready(
        contrastive_forward(xis, xjs, compute_dtype=jnp.float32))
    assert jnp.allclose(sim_f32, ref, atol=1e-5, rtol=1e-5), "f32 path mismatch"

    # --- exercise the multi-K accumulator path (D=256, forced tile_k=128) ---
    B2, D2 = 8, 256
    xis2 = jax.random.normal(k3, (B2, D2), dtype=jnp.float32)
    xjs2 = jax.random.normal(k4, (B2, D2), dtype=jnp.float32)
    ref2 = contrastive_forward_ref(xis2, xjs2)
    sim2 = jax.block_until_ready(
        contrastive_forward(xis2, xjs2, tile_k=128))
    assert sim2.shape == (2 * B2, 2 * B2)
    assert jnp.allclose(sim2, ref2, atol=2e-2, rtol=2e-2), "multi-K path mismatch"

    print("KERNEL_OK")
</pallas_src>

<mosaic_0001>
module attributes {stable_mosaic.version = 11 : i64} {
  func.func @_sim_tile_kernel_single_k(%arg0: i32, %arg1: i32, %arg2: memref<128x128xbf16, #tpu.memory_space<vmem>>, %arg3: memref<128x128xbf16, #tpu.memory_space<vmem>>, %arg4: memref<128x128xf32, #tpu.memory_space<vmem>>) attributes {dimension_semantics = [#tpu.dimension_semantics<parallel>, #tpu.dimension_semantics<parallel>], iteration_bounds = array<i64: 1, 1>, scalar_prefetch = 0 : i64, scratch_operands = 0 : i64, tpu.core_type = #tpu.core_type<tc>, window_params = [{transform_indices = @transform_0, window_bounds = array<i64: 128, 128>}, {transform_indices = @transform_1, window_bounds = array<i64: 128, 128>}, {transform_indices = @transform_2, window_bounds = array<i64: 128, 128>}]} {
    %c0 = arith.constant 0 : index
    %c0_0 = arith.constant 0 : index
    %0 = vector.load %arg2[%c0, %c0_0] : memref<128x128xbf16, #tpu.memory_space<vmem>>, vector<128x128xbf16>
    %c0_1 = arith.constant 0 : index
    %c0_2 = arith.constant 0 : index
    %1 = vector.load %arg3[%c0_1, %c0_2] : memref<128x128xbf16, #tpu.memory_space<vmem>>, vector<128x128xbf16>
    %cst = arith.constant dense<0.000000e+00> : vector<128x128xf32>
    %2 = tpu.matmul %0, %1, %cst {dimension_numbers = #tpu.dot_dimension_numbers<[1], [1], [0], [0], [0, 0, 1, 0], [], []>} : vector<128x128xbf16>, vector<128x128xbf16>, vector<128x128xf32> -> vector<128x128xf32>
    %c0_3 = arith.constant 0 : index
    %c0_4 = arith.constant 0 : index
    %3 = vector.load %arg4[%c0_3, %c0_4] : memref<128x128xf32, #tpu.memory_space<vmem>>, vector<128x128xf32>
    tpu.vector_store %arg4[%c0_3, %c0_4], %2 {strides = array<i32>} : memref<128x128xf32, #tpu.memory_space<vmem>>, vector<128x128xf32>,
    return
  }
  func.func @transform_0(%arg0: i32, %arg1: i32) -> (i32, i32) {
    %c0_i32 = arith.constant 0 : i32
    %c0_i32_0 = arith.constant 0 : i32
    return %arg0, %c0_i32 : i32, i32
  }
  func.func @transform_1(%arg0: i32, %arg1: i32) -> (i32, i32) {
    %c0_i32 = arith.constant 0 : i32
    %c0_i32_0 = arith.constant 0 : i32
    return %arg1, %c0_i32 : i32, i32
  }
  func.func @transform_2(%arg0: i32, %arg1: i32) -> (i32, i32) {
    %c0_i32 = arith.constant 0 : i32
    return %arg0, %arg1 : i32, i32
  }
}

</mosaic_0001>

<llo_original>
// kernel: tpu_custom_call.1
$region0: #{tpu_custom_call.1}
  #allocation0 [shape = 'u32[]', space=smem, size = 0x4, offset = 0x4, fixed_abs, tag = 'smem constant byte address 0x4 - core index']
  #allocation1 [shape = 'u32[144,128]{1,0:T(1,128)}', space=vmem, size = 0x12000, scoped, tag = 'internal scratch']
  %s0 = inlined_call_operand.hbm [shape: bf16[128,128], index: 0, kind: input, shape index: {}]
  %s1 = inlined_call_operand.hbm [shape: bf16[128,128], index: 1, kind: input, shape index: {}]
  %s2 = inlined_call_operand.hbm [shape: f32[128,128], index: 2, kind: output, shape index: {}]
  %s3 = sld [smem:[#allocation0]]
  $region26: #{tpu_custom_call.1} parent=0
    _
  %s5 = ssub.s32 1, %s3
  %s6 = scalar_select 0, %s5, %s3
  $region1: #{tpu_custom_call.1} parent=0
    #allocation2 [shape = 'u8[32768]{0}', space=vmem, size = 0x8000, scoped, tag = 'input window, operand 0, single buffered']
    #allocation3 [shape = 's32[1]{0}', space=sflag, size = 0x4, scoped, tag = 'scoped memory for tpu_custom_call.1']
    #allocation4 [shape = 's32[1]{0}', space=sflag, size = 0x4, scoped, tag = 'scoped memory for tpu_custom_call.1']
    #allocation5 [shape = 'u8[32768]{0}', space=vmem, size = 0x8000, scoped, tag = 'input window, operand 1, single buffered']
    #allocation6 [shape = 's32[1]{0}', space=sflag, size = 0x4, scoped, tag = 'scoped memory for tpu_custom_call.1']
    #allocation7 [shape = 'u8[65536]{0}', space=vmem, size = 0x10000, scoped, tag = 'output window, operand 0, single buffered']
    %7 = vsyncpa [#allocation3], 0
    %8 = vsyncpa [#allocation6], 0
    %9 = vsyncpa [#allocation4], 0
    // Predicated region
    $region2: #{tpu_custom_call.1} parent=1 // pred_check
      _
    $region3: #{tpu_custom_call.1} parent=1 // pred_check_branch
      %11 = sbr.rel (0) target = $region5
    $region4: #{tpu_custom_call.1} parent=1 // pred_region
      %s13 = ssub.s32 1024, 1024
      %14 = vsyncadd [#allocation3], %s13
      %s15 = sshll.u32 [#allocation2], 4
      %s16 = int_to_ptr.vmem [resolvable:$true] %s15
      %21 = dma.hbm_to_vmem [thread:$0]  %s0, 1024, %s16, [#allocation3], 64, 64, 4
    $region5: #{tpu_custom_call.1} parent=1 // pred_fallthru
      _
    // Predicated region
    $region6: #{tpu_custom_call.1} parent=1 // pred_check
      _
    $region7: #{tpu_custom_call.1} parent=1 // pred_check_branch
      %23 = sbr.rel (0) target = $region9
    $region8: #{tpu_custom_call.1} parent=1 // pred_region
      %s25 = ssub.s32 1024, 1024
      %26 = vsyncadd [#allocation6], %s25
      %s27 = sshll.u32 [#allocation5], 4
      %s28 = int_to_ptr.vmem [resolvable:$true] %s27
      %33 = dma.hbm_to_vmem [thread:$0]  %s1, 1024, %s28, [#allocation6], 64, 64, 4
    $region9: #{tpu_custom_call.1} parent=1 // pred_fallthru
      _
    // Predicated region
    $region10: #{tpu_custom_call.1} parent=1 // pred_check
      _
    $region11: #{tpu_custom_call.1} parent=1 // pred_check_branch
      %35 = sbr.rel (0) target = $region13
    $region12: #{tpu_custom_call.1} parent=1 // pred_region
      %36 = dma.done [#allocation3], 1024
    $region13: #{tpu_custom_call.1} parent=1 // pred_fallthru
      _
    // Predicated region
    $region14: #{tpu_custom_call.1} parent=1 // pred_check
      _
    $region15: #{tpu_custom_call.1} parent=1 // pred_check_branch
      %38 = sbr.rel (0) target = $region17
    $region16: #{tpu_custom_call.1} parent=1 // pred_region
      %39 = dma.done [#allocation6], 1024
    $region17: #{tpu_custom_call.1} parent=1 // pred_fallthru
      _
    %v41 = vld [vmem:[#allocation2] sm:$0xf]
    %v42 = vld [vmem:[#allocation2 + $0x4] sm:$0xf]
    %v43 = vld [vmem:[#allocation2 + $0x8] sm:$0xf]
    %v44 = vld [vmem:[#allocation2 + $0xc] sm:$0xf]
    %v45 = vld [vmem:[#allocation2 + $0x10] sm:$0xf]
    %v46 = vld [vmem:[#allocation2 + $0x14] sm:$0xf]
    %v47 = vld [vmem:[#allocation2 + $0x18] sm:$0xf]
    %v48 = vld [vmem:[#allocation2 + $0x1c] sm:$0xf]
    %v49 = vld [vmem:[#allocation2 + $0x20] sm:$0xf]
    %v50 = vld [vmem:[#allocation2 + $0x24] sm:$0xf]
    %v51 = vld [vmem:[#allocation2 + $0x28] sm:$0xf]
    %v52 = vld [vmem:[#allocation2 + $0x2c] sm:$0xf]
    %v53 = vld [vmem:[#allocation2 + $0x30] sm:$0xf]
    %v54 = vld [vmem:[#allocation2 + $0x34] sm:$0xf]
    %v55 = vld [vmem:[#allocation2 + $0x38] sm:$0xf]
    %v56 = vld [vmem:[#allocation2 + $0x3c] sm:$0xf]
    %v57 = vld [vmem:[#allocation5] sm:$0xf]
    %v58 = vld [vmem:[#allocation5 + $0x4] sm:$0xf]
    %v59 = vld [vmem:[#allocation5 + $0x8] sm:$0xf]
    %v60 = vld [vmem:[#allocation5 + $0xc] sm:$0xf]
    %v61 = vld [vmem:[#allocation5 + $0x10] sm:$0xf]
    %v62 = vld [vmem:[#allocation5 + $0x14] sm:$0xf]
    %v63 = vld [vmem:[#allocation5 + $0x18] sm:$0xf]
    %v64 = vld [vmem:[#allocation5 + $0x1c] sm:$0xf]
    %v65 = vld [vmem:[#allocation5 + $0x20] sm:$0xf]
    %v66 = vld [vmem:[#allocation5 + $0x24] sm:$0xf]
    %v67 = vld [vmem:[#allocation5 + $0x28] sm:$0xf]
    %v68 = vld [vmem:[#allocation5 + $0x2c] sm:$0xf]
    %v69 = vld [vmem:[#allocation5 + $0x30] sm:$0xf]
    %v70 = vld [vmem:[#allocation5 + $0x34] sm:$0xf]
    %v71 = vld [vmem:[#allocation5 + $0x38] sm:$0xf]
    %v72 = vld [vmem:[#allocation5 + $0x3c] sm:$0xf]
    %v89 = vunpack.c.l.b16 %v41
    %v90 = vunpack.c.l.b16 %v42
    %v91 = vunpack.c.l.b16 %v43
    %v92 = vunpack.c.l.b16 %v44
    %v93 = vunpack.c.l.b16 %v45
    %v94 = vunpack.c.l.b16 %v46
    %v95 = vunpack.c.l.b16 %v47
    %v96 = vunpack.c.l.b16 %v48
    %v97 = vunpack.c.l.b16 %v49
    %v98 = vunpack.c.l.b16 %v50
    %v99 = vunpack.c.l.b16 %v51
    %v100 = vunpack.c.l.b16 %v52
    %v101 = vunpack.c.l.b16 %v53
    %v102 = vunpack.c.l.b16 %v54
    %v103 = vunpack.c.l.b16 %v55
    %v104 = vunpack.c.l.b16 %v56
    %v105 = vpack.c.b16 %v90, %v89
    %v106 = vpack.c.b16 %v92, %v91
    %v107 = vpack.c.b16 %v94, %v93
    %v108 = vpack.c.b16 %v96, %v95
    %v109 = vpack.c.b16 %v98, %v97
    %v110 = vpack.c.b16 %v100, %v99
    %v111 = vpack.c.b16 %v102, %v101
    %v112 = vpack.c.b16 %v104, %v103
    %v137 = vunpack.c.l.b16 %v57
    %v138 = vunpack.c.l.b16 %v58
    %v139 = vunpack.c.l.b16 %v59
    %v140 = vunpack.c.l.b16 %v60
    %v141 = vunpack.c.l.b16 %v61
    %v142 = vunpack.c.l.b16 %v62
    %v143 = vunpack.c.l.b16 %v63
    %v144 = vunpack.c.l.b16 %v64
    %v145 = vunpack.c.l.b16 %v65
    %v146 = vunpack.c.l.b16 %v66
    %v147 = vunpack.c.l.b16 %v67
    %v148 = vunpack.c.l.b16 %v68
    %v149 = vunpack.c.l.b16 %v69
    %v150 = vunpack.c.l.b16 %v70
    %v151 = vunpack.c.l.b16 %v71
    %v152 = vunpack.c.l.b16 %v72
    %v153 = vpack.c.b16 %v138, %v137
    %v154 = vpack.c.b16 %v140, %v139
    %v155 = vpack.c.b16 %v142, %v141
    %v156 = vpack.c.b16 %v144, %v143
    %v157 = vpack.c.b16 %v146, %v145
    %v158 = vpack.c.b16 %v148, %v147
    %v159 = vpack.c.b16 %v150, %v149
    %v160 = vpack.c.b16 %v152, %v151
    %169 = vmatprep.subr.bf16.mxu0 0
    %170 = vmatpush1.bf16.xpose.msra.mxu0 %v160
    %171 = vmatprep.subr.bf16.mxu0 0
    %172 = vmatpush1.bf16.xpose.msra.mxu0 %v159
    %173 = vmatprep.subr.bf16.mxu0 0
    %174 = vmatpush1.bf16.xpose.msra.mxu0 %v158
    %175 = vmatprep.subr.bf16.mxu0 0
    %176 = vmatpush1.bf16.xpose.msra.mxu0 %v157
    %177 = vmatprep.subr.bf16.mxu0 0
    %178 = vmatpush1.bf16.xpose.msra.mxu0 %v156
    %179 = vmatprep.subr.bf16.mxu0 0
    %180 = vmatpush1.bf16.xpose.msra.mxu0 %v155
    %181 = vmatprep.subr.bf16.mxu0 0
    %182 = vmatpush1.bf16.xpose.msra.mxu0 %v154
    %183 = vmatprep.subr.bf16.mxu0 0
    %184 = vmatpush1.bf16.xpose.msra.mxu0 %v153
    %185 = vmatprep.subr.bf16.mxu0 0
    %186 = vmatpush2.bf16.xpose.msra.mxu0 0
    %187 = vmatprep.subr.bf16.mxu0 0
    %188 = vmatpush2.bf16.xpose.msra.mxu0 0
    %189 = vmatprep.subr.bf16.mxu0 0
    %190 = vmatpush2.bf16.xpose.msra.mxu0 0
    %191 = vmatprep.subr.bf16.mxu0 0
    %192 = vmatpush2.bf16.xpose.msra.mxu0 0
    %193 = vmatprep.subr.bf16.mxu0 0
    %194 = vmatpush2.bf16.xpose.msra.mxu0 0
    %195 = vmatprep.subr.bf16.mxu0 0
    %196 = vmatpush2.bf16.xpose.msra.mxu0 0
    %197 = vmatprep.subr.bf16.mxu0 0
    %198 = vmatpush2.bf16.xpose.msra.mxu0 0
    %199 = vmatprep.subr.bf16.mxu0 0
    %200 = vmatpush2.bf16.xpose.msra.mxu0 0
    %201 = vmatprep.mubr.bf16.mxu0 0
    %202 = vmatmul.mubr.bf16.gmra.mxu0 %v105
    %v203 = vpop.f32.mrf.mxu0
    %v204 = vadd.f32 0.0, %v203
    %v205 = vpop.f32.mrf.mxu0
    %v206 = vpop.f32.mrf.mxu0
    %v207 = vadd.f32 0.0, %v206
    %v208 = vpop.f32.mrf.mxu0
    %209 = vmatprep.mubr.bf16.mxu0 0
    %210 = vmatmul.mubr.bf16.gmra.mxu0 %v106
    %v211 = vpop.f32.mrf.mxu0
    %v212 = vadd.f32 0.0, %v211
    %v213 = vpop.f32.mrf.mxu0
    %v214 = vpop.f32.mrf.mxu0
    %v215 = vadd.f32 0.0, %v214
    %v216 = vpop.f32.mrf.mxu0
    %217 = vmatprep.mubr.bf16.mxu0 0
    %218 = vmatmul.mubr.bf16.gmra.mxu0 %v107
    %v219 = vpop.f32.mrf.mxu0
    %v220 = vadd.f32 0.0, %v219
    %v221 = vpop.f32.mrf.mxu0
    %v222 = vpop.f32.mrf.mxu0
    %v223 = vadd.f32 0.0, %v222
    %v224 = vpop.f32.mrf.mxu0
    %225 = vmatprep.mubr.bf16.mxu0 0
    %226 = vmatmul.mubr.bf16.gmra.mxu0 %v108
    %v227 = vpop.f32.mrf.mxu0
    %v228 = vadd.f32 0.0, %v227
    %v229 = vpop.f32.mrf.mxu0
    %v230 = vpop.f32.mrf.mxu0
    %v231 = vadd.f32 0.0, %v230
    %v232 = vpop.f32.mrf.mxu0
    %233 = vmatprep.mubr.bf16.mxu0 0
    %234 = vmatmul.mubr.bf16.gmra.mxu0 %v109
    %v235 = vpop.f32.mrf.mxu0
    %v236 = vadd.f32 0.0, %v235
    %v237 = vpop.f32.mrf.mxu0
    %v238 = vpop.f32.mrf.mxu0
    %v239 = vadd.f32 0.0, %v238
    %v240 = vpop.f32.mrf.mxu0
    %241 = vmatprep.mubr.bf16.mxu0 0
    %242 = vmatmul.mubr.bf16.gmra.mxu0 %v110
    %v243 = vpop.f32.mrf.mxu0
    %v244 = vadd.f32 0.0, %v243
    %v245 = vpop.f32.mrf.mxu0
    %v246 = vpop.f32.mrf.mxu0
    %v247 = vadd.f32 0.0, %v246
    %v248 = vpop.f32.mrf.mxu0
    %249 = vmatprep.mubr.bf16.mxu0 0
    %250 = vmatmul.mubr.bf16.gmra.mxu0 %v111
    %v251 = vpop.f32.mrf.mxu0
    %v252 = vadd.f32 0.0, %v251
    %v253 = vpop.f32.mrf.mxu0
    %v254 = vpop.f32.mrf.mxu0
    %v255 = vadd.f32 0.0, %v254
    %v256 = vpop.f32.mrf.mxu0
    %257 = vmatprep.mubr.bf16.mxu0 0
    %258 = vmatmul.mubr.bf16.gmra.mxu0 %v112
    %v259 = vpop.f32.mrf.mxu0
    %v260 = vadd.f32 0.0, %v259
    %v261 = vpop.f32.mrf.mxu0
    %v262 = vpop.f32.mrf.mxu0
    %v263 = vadd.f32 0.0, %v262
    %v264 = vpop.f32.mrf.mxu0
    %265 = vdwg.mxu0
    %266 = vst [vmem:[#allocation7] sm:$0xff] %v204
    %267 = vst [vmem:[#allocation7 + $0x8] sm:$0xff] %v207
    %268 = vst [vmem:[#allocation7 + $0x10] sm:$0xff] %v212
    %269 = vst [vmem:[#allocation7 + $0x18] sm:$0xff] %v215
    %270 = vst [vmem:[#allocation7 + $0x20] sm:$0xff] %v220
    %271 = vst [vmem:[#allocation7 + $0x28] sm:$0xff] %v223
    %272 = vst [vmem:[#allocation7 + $0x30] sm:$0xff] %v228
    %273 = vst [vmem:[#allocation7 + $0x38] sm:$0xff] %v231
    %274 = vst [vmem:[#allocation7 + $0x40] sm:$0xff] %v236
    %275 = vst [vmem:[#allocation7 + $0x48] sm:$0xff] %v239
    %276 = vst [vmem:[#allocation7 + $0x50] sm:$0xff] %v244
    %277 = vst [vmem:[#allocation7 + $0x58] sm:$0xff] %v247
    %278 = vst [vmem:[#allocation7 + $0x60] sm:$0xff] %v252
    %279 = vst [vmem:[#allocation7 + $0x68] sm:$0xff] %v255
    %280 = vst [vmem:[#allocation7 + $0x70] sm:$0xff] %v260
    %281 = vst [vmem:[#allocation7 + $0x78] sm:$0xff] %v263
    // Predicated region
    $region18: #{tpu_custom_call.1} parent=1 // pred_check
      _
    $region19: #{tpu_custom_call.1} parent=1 // pred_check_branch
      %283 = sbr.rel (0) target = $region21
    $region20: #{tpu_custom_call.1} parent=1 // pred_region
      %s285 = ssub.s32 2048, 2048
      %286 = vsyncadd [#allocation4], %s285
      %s287 = sshll.u32 [#allocation7], 4
      %s288 = int_to_ptr.vmem [resolvable:$true] %s287
      %293 = dma.vmem_to_hbm [thread:$0]  %s288, 2048, %s2, [#allocation4], 128, 128, 8
    $region21: #{tpu_custom_call.1} parent=1 // pred_fallthru
      _
    // Predicated region
    $region22: #{tpu_custom_call.1} parent=1 // pred_check
      _
    $region23: #{tpu_custom_call.1} parent=1 // pred_check_branch
      %295 = sbr.rel (0) target = $region25
    $region24: #{tpu_custom_call.1} parent=1 // pred_region
      %296 = dma.done [#allocation4], 2048
    $region25: #{tpu_custom_call.1} parent=1 // pred_fallthru
      _
    %297 = vsyncpa [#allocation3], 1
    %298 = vsyncpa [#allocation6], 1
    %299 = vsyncpa [#allocation4], 1

</llo_original>
